<compile_context>
chip_gen: v5e
topology: v5e:2x2
jax: 0.10.0
libtpu: 0.0.40
codegen_flags: <defaults>
</compile_context>

<pallas_src>
import jax
import jax.numpy as jnp
from jax.experimental import pallas as pl
from jax.experimental.pallas import tpu as pltpu


def _corr_kernel(a_ref, b_ref, out_ref):
    # a_ref:   (1, TM, C)  LHS tile  (k rows, channels on lanes -- tiny operand)
    # b_ref:   (1, C, TN)  RHS tile  (channels, m on lanes -- lane-dense)
    # out_ref: (1, TM, TN) output tile (lane-dense, unmasked stores)
    out_ref[0] = jnp.dot(
        a_ref[0], b_ref[0], preferred_element_type=jnp.float32
    ).astype(out_ref.dtype)


def _pick_tile(total, preferred, align):
    t = min(preferred, total)
    if t == total:
        return total  # full-extent block is always legal
    return max(align, (t // align) * align)


def feature_correlation(feature_A, feature_B, *, tm=256, tn=256,
                        operand_dtype=None, out_dtype=jnp.float32):
    """feature_A, feature_B: (b, c, h, w) NCHW arrays. Returns (b, h*w, h, w)."""
    b, c, h, w = feature_A.shape
    hw = h * w

    # bf16 operands (f32 accumulate) when the contraction is large enough that
    # MXU throughput matters; keep input precision for tiny C (mem-bound).
    if operand_dtype is None:
        operand_dtype = jnp.bfloat16 if c >= 128 else feature_A.dtype
    operand_dtype = jnp.dtype(operand_dtype)
    out_dtype = jnp.dtype(out_dtype)

    # LHS: A2[b, k, c] = A[b, c, k % h, k // h]  (k = i_w*h + i_h, i.e. the
    # module's transpose(2,3)).  Only the small operand is transposed; the cast
    # fuses into the same pass.
    a2 = jnp.transpose(feature_A, (0, 3, 2, 1)).reshape(b, hw, c).astype(operand_dtype)
    # RHS: B2[b, c, m] = B[b, c, m // w, m % w]  -- a pure reshape, no copy.
    b2 = feature_B.reshape(b, c, hw).astype(operand_dtype)

    # Output tiling: tm on sublanes (multiple of 8), tn on lanes (multiple of
    # 128).  256x256 matches the v6e/v7x MXU and is 128-aligned for v5e.
    tm = _pick_tile(hw, tm, 8)
    tn = _pick_tile(hw, tn, 128)
    grid = (b, pl.cdiv(hw, tm), pl.cdiv(hw, tn))

    cost = pl.CostEstimate(
        flops=2 * b * hw * hw * c,
        transcendentals=0,
        bytes_accessed=b * hw * hw * out_dtype.itemsize
        + 2 * b * hw * c * operand_dtype.itemsize,
    )

    mul = pl.pallas_call(
        _corr_kernel,
        out_shape=jax.ShapeDtypeStruct((b, hw, hw), out_dtype),
        grid=grid,
        in_specs=[
            # LHS tile: full channel extent, tm rows of k.
            pl.BlockSpec((1, tm, c), lambda bi, mi, ni: (bi, mi, 0)),
            # RHS tile: full channel extent, tn lane-dense columns of m.
            pl.BlockSpec((1, c, tn), lambda bi, mi, ni: (bi, 0, ni)),
        ],
        out_specs=pl.BlockSpec((1, tm, tn), lambda bi, mi, ni: (bi, mi, ni)),
        compiler_params=pltpu.CompilerParams(
            # Full-C contraction per block => no reduction grid axis; every
            # axis is parallel so v7x can shard tiles across both TensorCores.
            dimension_semantics=("parallel", "parallel", "parallel"),
            # Double-buffered tiles at default sizes are only a few MiB; 32 MiB
            # is portable across v5e/v6e (128 MiB VMEM) and v7x (64 MiB).
            vmem_limit_bytes=32 * 1024 * 1024,
        ),
        cost_estimate=cost,
    )(a2, b2)

    # (b, hw_k, hw_m) -> (b, hw, h, w) is a pure view (m = i*w + j already).
    return mul.reshape(b, hw, h, w)


def _reference(feature_A, feature_B):
    b, c, h, w = feature_A.shape
    a2 = jnp.transpose(feature_A, (0, 1, 3, 2)).reshape(b, c, h * w)
    b2 = jnp.transpose(feature_B.reshape(b, c, h * w), (0, 2, 1))
    mul = jnp.einsum("bmc,bck->bmk", b2, a2)
    return jnp.transpose(mul.reshape(b, h, w, h * w), (0, 3, 1, 2))


if __name__ == "__main__":
    key = jax.random.PRNGKey(0)
    k1, k2, k3, k4 = jax.random.split(key, 4)

    # Small shapes consistent with the module's NCHW convention.
    bsz, ch, hh, ww = 2, 4, 16, 16
    feature_A = jax.random.normal(k1, (bsz, ch, hh, ww), dtype=jnp.float32)
    feature_B = jax.random.normal(k2, (bsz, ch, hh, ww), dtype=jnp.float32)

    # Default path (small C => f32 operands), full-extent tiles.
    out = jax.block_until_ready(feature_correlation(feature_A, feature_B))
    ref = _reference(feature_A, feature_B)
    assert out.shape == (bsz, hh * ww, hh, ww), out.shape
    assert jnp.allclose(out, ref, atol=1e-5, rtol=1e-5)

    # Multi-tile grid (tm=tn=128 < hw) to validate the tiled/parallel path.
    out_tiled = jax.block_until_ready(
        feature_correlation(feature_A, feature_B, tm=128, tn=128)
    )
    assert jnp.allclose(out_tiled, ref, atol=1e-5, rtol=1e-5)

    # Larger C exercises the auto bf16-operand / f32-accumulate path; validate
    # against a reference that applies the same operand rounding.
    ch_big = 128
    fa_big = jax.random.normal(k3, (bsz, ch_big, hh, ww), dtype=jnp.float32)
    fb_big = jax.random.normal(k4, (bsz, ch_big, hh, ww), dtype=jnp.float32)
    out_big = jax.block_until_ready(feature_correlation(fa_big, fb_big))
    ref_big = _reference(
        fa_big.astype(jnp.bfloat16).astype(jnp.float32),
        fb_big.astype(jnp.bfloat16).astype(jnp.float32),
    )
    assert out_big.shape == (bsz, hh * ww, hh, ww), out_big.shape
    assert jnp.allclose(out_big, ref_big, atol=1e-2, rtol=1e-2)

    print("KERNEL_OK")
</pallas_src>

<mosaic_0001>
module attributes {stable_mosaic.version = 11 : i64} {
  func.func @_corr_kernel(%arg0: i32, %arg1: i32, %arg2: i32, %arg3: memref<1x256x4xf32, #tpu.memory_space<vmem>>, %arg4: memref<1x4x256xf32, #tpu.memory_space<vmem>>, %arg5: memref<1x256x256xf32, #tpu.memory_space<vmem>>) attributes {dimension_semantics = [#tpu.dimension_semantics<parallel>, #tpu.dimension_semantics<parallel>, #tpu.dimension_semantics<parallel>], iteration_bounds = array<i64: 2, 1, 1>, scalar_prefetch = 0 : i64, scratch_operands = 0 : i64, tpu.core_type = #tpu.core_type<tc>, window_params = [{transform_indices = @transform_0, window_bounds = array<i64: 1, 256, 4>}, {transform_indices = @transform_1, window_bounds = array<i64: 1, 4, 256>}, {transform_indices = @transform_2, window_bounds = array<i64: 1, 256, 256>}]} {
    %c0 = arith.constant 0 : index
    %c0_0 = arith.constant 0 : index
    %c0_1 = arith.constant 0 : index
    %0 = vector.load %arg3[%c0, %c0_0, %c0_1] : memref<1x256x4xf32, #tpu.memory_space<vmem>>, vector<1x256x4xf32>
    %1 = vector.shape_cast %0 : vector<1x256x4xf32> to vector<256x4xf32>
    %c0_2 = arith.constant 0 : index
    %c0_3 = arith.constant 0 : index
    %c0_4 = arith.constant 0 : index
    %2 = vector.load %arg4[%c0_2, %c0_3, %c0_4] : memref<1x4x256xf32, #tpu.memory_space<vmem>>, vector<1x4x256xf32>
    %3 = vector.shape_cast %2 : vector<1x4x256xf32> to vector<4x256xf32>
    %cst = arith.constant dense<0.000000e+00> : vector<256x256xf32>
    %4 = tpu.matmul %1, %3, %cst {dimension_numbers = #tpu.dot_dimension_numbers<[1], [0], [0], [1], [0, 0, 1, 1], [], []>} : vector<256x4xf32>, vector<4x256xf32>, vector<256x256xf32> -> vector<256x256xf32>
    %c0_5 = arith.constant 0 : index
    %c0_6 = arith.constant 0 : index
    %c0_7 = arith.constant 0 : index
    %5 = vector.load %arg5[%c0_5, %c0_6, %c0_7] : memref<1x256x256xf32, #tpu.memory_space<vmem>>, vector<1x256x256xf32>
    %6 = vector.shape_cast %5 : vector<1x256x256xf32> to vector<256x256xf32>
    %7 = vector.shape_cast %4 : vector<256x256xf32> to vector<1x256x256xf32>
    tpu.vector_store %arg5[%c0_5, %c0_6, %c0_7], %7 {strides = array<i32>} : memref<1x256x256xf32, #tpu.memory_space<vmem>>, vector<1x256x256xf32>,
    return
  }
  func.func @transform_0(%arg0: i32, %arg1: i32, %arg2: i32) -> (i32, i32, i32) {
    %c0_i32 = arith.constant 0 : i32
    %c0_i32_0 = arith.constant 0 : i32
    return %arg0, %arg1, %c0_i32 : i32, i32, i32
  }
  func.func @transform_1(%arg0: i32, %arg1: i32, %arg2: i32) -> (i32, i32, i32) {
    %c0_i32 = arith.constant 0 : i32
    %c0_i32_0 = arith.constant 0 : i32
    return %arg0, %c0_i32, %arg2 : i32, i32, i32
  }
  func.func @transform_2(%arg0: i32, %arg1: i32, %arg2: i32) -> (i32, i32, i32) {
    %c0_i32 = arith.constant 0 : i32
    return %arg0, %arg1, %arg2 : i32, i32, i32
  }
}

</mosaic_0001>

<llo_original>
// kernel: tpu_custom_call.1
$region0: #{tpu_custom_call.1}
  #allocation0 [shape = 'u32[]', space=smem, size = 0x4, offset = 0x4, fixed_abs, tag = 'smem constant byte address 0x4 - core index']
  #allocation1 [shape = 'u32[72,128]{1,0:T(1,128)}', space=vmem, size = 0x9000, scoped, tag = 'internal scratch']
  %s0 = inlined_call_operand.vmem [shape: f32[2,256,4], index: 0, kind: input, shape index: {}]
  %s1 = inlined_call_operand.vmem [shape: f32[2,4,256], index: 1, kind: input, shape index: {}]
  %s2 = inlined_call_operand.hbm [shape: f32[2,256,256], index: 2, kind: output, shape index: {}]
  %s3 = sld [smem:[#allocation0]]
  $region41: #{tpu_custom_call.1} parent=0
    _
  %s5 = ssub.s32 1, %s3
  %s6 = scalar_select 0, %s5, %s3
  $region1: #{tpu_custom_call.1} parent=0
    #allocation2 [shape = 'u8[524288]{0}', space=vmem, size = 0x80000, scoped, tag = 'output window, operand 0']
    #allocation3 [shape = 's32[2]{0}', space=sflag, size = 0x8, scoped, tag = 'scoped memory for tpu_custom_call.1']
    %7 = vsyncpa [#allocation3], 0
    %s8 = scalar_lea.sflag [#allocation3], 1
    %9 = vsyncpa %s8, 0
    loop: start=0, step=1, limit=4
    $region2: #{tpu_custom_call.1} parent=1 // loop_pre_header
      _
    $region3: #{tpu_custom_call.1} parent=1 // loop_header
      %s11 = sphi 0, %s15
      %p12 = scmp.ge.s32.totalorder %s11, 4
      %s18 = sphi 0, %s37
      %s19 = sphi 0, %s33
      %s20 = sphi 0, %s29
      %s21 = sphi 0, %s18
      %s22 = sphi 0, %s19
      %s23 = sphi 0, %s20
      %s24 = sphi 0, %s21
      %s25 = sphi 0, %s22
      %s26 = sphi 0, %s23
      %s42 = sphi 0, %s44
      %s45 = sphi 0, %s42
      %s46 = sphi 0, %s45
      %s62 = sphi 0, %s46
      %s70 = sphi 0, %s72
      %s73 = sphi 0, %s70
      %s74 = sphi 0, %s73
      %s90 = sphi 0, %s74
      %s100 = sphi 0, %s102
      %s103 = sphi 0, %s100
      %s104 = sphi 0, %s103
      %s120 = sphi 0, %s104
    $region4: #{tpu_custom_call.1} parent=1 // loop_header_branch
      %14 = sbr.rel (%p12) target = $region8
    $region5: #{tpu_custom_call.1} parent=1 // loop_body
      %s16 = ssub.s32 %s11, 1
      %s17 = ssub.s32 %s11, 2
      %s27 = sadd.s32 1, %s20
      %p28 = scmp.ge.s32.totalorder %s27, 1
      %s29 = scalar_select %p28, 0, %s27
      %s30 = sadd.s32 1, %s19
      %s31 = scalar_select %p28, %s30, %s19
      %p32 = scmp.ge.s32.totalorder %s31, 1
      %s33 = scalar_select %p32, 0, %s31
      %s34 = sadd.s32 1, %s18
      %s35 = scalar_select %p32, %s34, %s18
      %p36 = scmp.ge.s32.totalorder %s35, 2
      %s37 = scalar_select %p36, 0, %s35
      %s38 = ssub.s32 %s18, %s37
      %s39 = ssub.s32 %s19, %s33
      %s40 = sor.u32 %s38, %s39
      %p41 = scmp.eq.s32.totalorder %s40, 0
      %s43 = sadd.s32 %s42, 1
      %s44 = scalar_select %p41, %s42, %s43
      %p47 = pneg %p41
      %p48 = scmp.eq.s32.totalorder %s11, 1
      %p49 = por %p47, %p48
      %p50 = scmp.ne.s32.totalorder %s42, %s45
      %p51 = scmp.eq.s32.totalorder %s11, 0
      %p52 = por %p50, %p51
      %p53 = scmp.ne.s32.totalorder %s42, %s45
      %p54 = scmp.eq.s32.totalorder %s16, 1
      %p55 = por %p53, %p54
      %p56 = scmp.ne.s32.totalorder %s45, %s46
      %p57 = scmp.eq.s32.totalorder %s16, 0
      %p58 = por %p56, %p57
      %p59 = scmp.ne.s32.totalorder %s45, %s46
      %p60 = scmp.eq.s32.totalorder %s17, 1
      %p61 = por %p59, %p60
      %p63 = scmp.ne.s32.totalorder %s46, %s62
      %p64 = scmp.eq.s32.totalorder %s17, 0
      %p65 = por %p63, %p64
      %s66 = ssub.s32 %s18, %s37
      %s67 = ssub.s32 %s20, %s29
      %s68 = sor.u32 %s66, %s67
      %p69 = scmp.eq.s32.totalorder %s68, 0
      %s71 = sadd.s32 %s70, 1
      %s72 = scalar_select %p69, %s70, %s71
      %p75 = pneg %p69
      %p76 = scmp.eq.s32.totalorder %s11, 1
      %p77 = por %p75, %p76
      %p78 = scmp.ne.s32.totalorder %s70, %s73
      %p79 = scmp.eq.s32.totalorder %s11, 0
      %p80 = por %p78, %p79
      %p81 = scmp.ne.s32.totalorder %s70, %s73
      %p82 = scmp.eq.s32.totalorder %s16, 1
      %p83 = por %p81, %p82
      %p84 = scmp.ne.s32.totalorder %s73, %s74
      %p85 = scmp.eq.s32.totalorder %s16, 0
      %p86 = por %p84, %p85
      %p87 = scmp.ne.s32.totalorder %s73, %s74
      %p88 = scmp.eq.s32.totalorder %s17, 1
      %p89 = por %p87, %p88
      %p91 = scmp.ne.s32.totalorder %s74, %s90
      %p92 = scmp.eq.s32.totalorder %s17, 0
      %p93 = por %p91, %p92
      %s94 = ssub.s32 %s18, %s37
      %s95 = ssub.s32 %s19, %s33
      %s96 = sor.u32 %s94, %s95
      %s97 = ssub.s32 %s20, %s29
      %s98 = sor.u32 %s96, %s97
      %p99 = scmp.eq.s32.totalorder %s98, 0
      %s101 = sadd.s32 %s100, 1
      %s102 = scalar_select %p99, %s100, %s101
      %p105 = pneg %p99
      %p106 = scmp.eq.s32.totalorder %s11, 1
      %p107 = por %p105, %p106
      %p108 = scmp.ne.s32.totalorder %s100, %s103
      %p109 = scmp.eq.s32.totalorder %s11, 0
      %p110 = por %p108, %p109
      %p111 = scmp.ne.s32.totalorder %s100, %s103
      %p112 = scmp.eq.s32.totalorder %s16, 1
      %p113 = por %p111, %p112
      %p114 = scmp.ne.s32.totalorder %s103, %s104
      %p115 = scmp.eq.s32.totalorder %s16, 0
      %p116 = por %p114, %p115
      %p117 = scmp.ne.s32.totalorder %s103, %s104
      %p118 = scmp.eq.s32.totalorder %s17, 1
      %p119 = por %p117, %p118
      %p121 = scmp.ne.s32.totalorder %s104, %s120
      %p122 = scmp.eq.s32.totalorder %s17, 0
      %p123 = por %p121, %p122
      %p124 = scmp.le.s32.totalorder 1, %s11
      %p125 = scmp.lt.s32.totalorder %s11, 3
      %p126 = pnand %p124, %p125
      %p127 = pneg %p126
      // Predicated region
      $region9: #{tpu_custom_call.1} parent=5 // pred_check
        _
      $region10: #{tpu_custom_call.1} parent=5 // pred_check_branch
        %129 = sbr.rel (%p126) target = $region12
      $region11: #{tpu_custom_call.1} parent=5 // pred_region
        %s130 = ssub.s32 %s11, 1
      $region12: #{tpu_custom_call.1} parent=5 // pred_fallthru
        _
      %p131 = scmp.lt.s32.totalorder %s11, 2
      // Predicated region
      $region13: #{tpu_custom_call.1} parent=5 // pred_check
        %p132 = pneg %p131
      $region14: #{tpu_custom_call.1} parent=5 // pred_check_branch
        %134 = sbr.rel (%p132) target = $region16
      $region15: #{tpu_custom_call.1} parent=5 // pred_region
        // Predicated region
        $region17: #{tpu_custom_call.1} parent=15 // pred_check
          %p135 = pneg %p52
        $region18: #{tpu_custom_call.1} parent=15 // pred_check_branch
          %137 = sbr.rel (%p135) target = $region20
        $region19: #{tpu_custom_call.1} parent=15 // pred_region
          %s138 = smul.u32 32, %s19
          %p139 = scmp.lt.s32.totalorder %s18, 1
          %s140 = scalar_select %p139, %s18, 1
          %p141 = scmp.lt.s32.totalorder %s138, 31
          %s142 = scalar_select %p141, %s138, 31
          %s143 = smul.addr %s140, 32
          %s144 = sadd.s32 %s142, %s143
          %s145 = smul.addr %s144, 8
          %s146 = scalar_lea.vmem %s0, %s145
          %s147 = smul.u32 32, %s19
        $region20: #{tpu_custom_call.1} parent=15 // pred_fallthru
          _
        // Predicated region
        $region21: #{tpu_custom_call.1} parent=15 // pred_check
          %p148 = pneg %p80
        $region22: #{tpu_custom_call.1} parent=15 // pred_check_branch
          %150 = sbr.rel (%p148) target = $region24
        $region23: #{tpu_custom_call.1} parent=15 // pred_region
          %s151 = smul.u32 2, %s20
          %p152 = scmp.lt.s32.totalorder %s18, 1
          %s153 = scalar_select %p152, %s18, 1
          %p154 = scmp.lt.s32.totalorder %s151, 1
          %s155 = scalar_select %p154, %s151, 1
          %s156 = smul.addr %s153, 2
          %s157 = sadd.s32 %s155, %s156
          %s158 = smul.addr %s157, 4
          %s159 = scalar_lea.vmem %s1, %s158
          %s160 = smul.u32 2, %s20
        $region24: #{tpu_custom_call.1} parent=15 // pred_fallthru
          _
      $region16: #{tpu_custom_call.1} parent=5 // pred_fallthru
        _
      %p161 = scmp.le.s32.totalorder 1, %s11
      %p162 = scmp.lt.s32.totalorder %s11, 3
      %p163 = pnand %p161, %p162
      %p164 = pneg %p163
      // Predicated region
      $region25: #{tpu_custom_call.1} parent=5 // pred_check
        _
      $region26: #{tpu_custom_call.1} parent=5 // pred_check_branch
        %166 = sbr.rel (%p163) target = $region28
      $region27: #{tpu_custom_call.1} parent=5 // pred_region
        %s167 = ssub.s32 %s11, 1
        %s168 = smul.u32 32, %s22
        %p169 = scmp.lt.s32.totalorder %s21, 1
        %s170 = scalar_select %p169, %s21, 1
        %p171 = scmp.lt.s32.totalorder %s168, 31
        %s172 = scalar_select %p171, %s168, 31
        %s173 = smul.addr %s170, 32
        %s174 = sadd.s32 %s172, %s173
        %s175 = smul.addr %s174, 8
        %s176 = scalar_lea.vmem %s0, %s175
        %p177 = pneg %p58
        %p178 = pneg %p55
        %s179 = smul.u32 2, %s23
        %p180 = scmp.lt.s32.totalorder %s21, 1
        %s181 = scalar_select %p180, %s21, 1
        %p182 = scmp.lt.s32.totalorder %s179, 1
        %s183 = scalar_select %p182, %s179, 1
        %s184 = smul.addr %s181, 2
        %s185 = sadd.s32 %s183, %s184
        %s186 = smul.addr %s185, 4
        %s187 = scalar_lea.vmem %s1, %s186
        %p188 = pneg %p86
        %p189 = pneg %p83
        %p190 = pneg %p116
        %p191 = pneg %p113
        %s192 = sand.u32 %s103, 1
        %s193 = scalar_lea.sflag [#allocation3], %s192
        %s194 = sand.u32 %s103, 1
        %s195 = smul.addr %s194, 512
        %s196 = scalar_lea.vmem [#allocation2], %s195
        %s197 = smul.u32 32, %s22
        %p198 = scmp.lt.s32.totalorder %s21, 1
        %s199 = scalar_select %p198, %s21, 1
        %p200 = scmp.lt.s32.totalorder %s197, 31
        %s201 = scalar_select %p200, %s197, 31
        %s202 = smul.addr %s199, 32
        %s203 = sadd.s32 %s201, %s202
        %s204 = smul.addr %s203, 8
        %s205 = scalar_lea.vmem %s0, %s204
        %s206 = smul.u32 32, %s22
        %s207 = smul.u32 2, %s23
        %p208 = scmp.lt.s32.totalorder %s21, 1
        %s209 = scalar_select %p208, %s21, 1
        %p210 = scmp.lt.s32.totalorder %s207, 1
        %s211 = scalar_select %p210, %s207, 1
        %s212 = smul.addr %s209, 2
        %s213 = sadd.s32 %s211, %s212
        %s214 = smul.addr %s213, 4
        %s215 = scalar_lea.vmem %s1, %s214
        %s216 = smul.u32 2, %s23
        %s217 = smul.u32 32, %s22
        %s218 = smul.u32 2, %s23
        %v219 = vld [vmem:[%s205] sm:$0xff]
        %v220 = vld [vmem:[%s205 + $0x8] sm:$0xff]
        %v221 = vld [vmem:[%s205 + $0x10] sm:$0xff]
        %v222 = vld [vmem:[%s205 + $0x18] sm:$0xff]
        %v223 = vld [vmem:[%s205 + $0x20] sm:$0xff]
        %v224 = vld [vmem:[%s205 + $0x28] sm:$0xff]
        %v225 = vld [vmem:[%s205 + $0x30] sm:$0xff]
        %v226 = vld [vmem:[%s205 + $0x38] sm:$0xff]
        %v227 = vld [vmem:[%s205 + $0x40] sm:$0xff]
        %v228 = vld [vmem:[%s205 + $0x48] sm:$0xff]
        %v229 = vld [vmem:[%s205 + $0x50] sm:$0xff]
        %v230 = vld [vmem:[%s205 + $0x58] sm:$0xff]
        %v231 = vld [vmem:[%s205 + $0x60] sm:$0xff]
        %v232 = vld [vmem:[%s205 + $0x68] sm:$0xff]
        %v233 = vld [vmem:[%s205 + $0x70] sm:$0xff]
        %v234 = vld [vmem:[%s205 + $0x78] sm:$0xff]
        %v235 = vld [vmem:[%s205 + $0x80] sm:$0xff]
        %v236 = vld [vmem:[%s205 + $0x88] sm:$0xff]
        %v237 = vld [vmem:[%s205 + $0x90] sm:$0xff]
        %v238 = vld [vmem:[%s205 + $0x98] sm:$0xff]
        %v239 = vld [vmem:[%s205 + $0xa0] sm:$0xff]
        %v240 = vld [vmem:[%s205 + $0xa8] sm:$0xff]
        %v241 = vld [vmem:[%s205 + $0xb0] sm:$0xff]
        %v242 = vld [vmem:[%s205 + $0xb8] sm:$0xff]
        %v243 = vld [vmem:[%s205 + $0xc0] sm:$0xff]
        %v244 = vld [vmem:[%s205 + $0xc8] sm:$0xff]
        %v245 = vld [vmem:[%s205 + $0xd0] sm:$0xff]
        %v246 = vld [vmem:[%s205 + $0xd8] sm:$0xff]
        %v247 = vld [vmem:[%s205 + $0xe0] sm:$0xff]
        %v248 = vld [vmem:[%s205 + $0xe8] sm:$0xff]
        %v249 = vld [vmem:[%s205 + $0xf0] sm:$0xff]
        %v250 = vld [vmem:[%s205 + $0xf8] sm:$0xff]
        %v251 = vld [vmem:[%s215] sm:$0xff]
        %253 = vst [vmem:[#allocation1] ss:$2 sm:$0xff] %v251
        %v254 = vld.sshfl [vmem:[#allocation1] sm:$0xff pattern:$0x75316420]
        %v255 = vld.sshfl [vmem:[#allocation1 + $0x8] sm:$0xff pattern:$0x75316420]
        %vm256 = vcmask 31744
        %v258 = vsel %vm256, %v219, 0
        %v261 = vsel %vm256, %v220, 0
        %v264 = vsel %vm256, %v221, 0
        %v267 = vsel %vm256, %v222, 0
        %v270 = vsel %vm256, %v223, 0
        %v273 = vsel %vm256, %v224, 0
        %v276 = vsel %vm256, %v225, 0
        %v279 = vsel %vm256, %v226, 0
        %v282 = vsel %vm256, %v227, 0
        %v285 = vsel %vm256, %v228, 0
        %v288 = vsel %vm256, %v229, 0
        %v291 = vsel %vm256, %v230, 0
        %v294 = vsel %vm256, %v231, 0
        %v297 = vsel %vm256, %v232, 0
        %v300 = vsel %vm256, %v233, 0
        %v303 = vsel %vm256, %v234, 0
        %v306 = vsel %vm256, %v235, 0
        %v309 = vsel %vm256, %v236, 0
        %v312 = vsel %vm256, %v237, 0
        %v315 = vsel %vm256, %v238, 0
        %v318 = vsel %vm256, %v239, 0
        %v321 = vsel %vm256, %v240, 0
        %v324 = vsel %vm256, %v241, 0
        %v327 = vsel %vm256, %v242, 0
        %v330 = vsel %vm256, %v243, 0
        %v333 = vsel %vm256, %v244, 0
        %v336 = vsel %vm256, %v245, 0
        %v339 = vsel %vm256, %v246, 0
        %v342 = vsel %vm256, %v247, 0
        %v345 = vsel %vm256, %v248, 0
        %v348 = vsel %vm256, %v249, 0
        %v351 = vsel %vm256, %v250, 0
        %vm353 = vcmask 1043456
        %v354 = vsel %vm353, %v254, 0
        %v356 = vsel %vm353, %v255, 0
        %358 = vmatpush.msra.mxu0 0.0
        %359 = vmatpush.msra.mxu0 0.0
        %360 = vmatpush.msra.mxu0 0.0
        %361 = vmatpush.msra.mxu0 0.0
        %362 = vmatpush.msra.mxu0 0.0
        %363 = vmatpush.msra.mxu0 0.0
        %364 = vmatpush.msra.mxu0 0.0
        %365 = vmatpush.msra.mxu0 0.0
        %366 = vmatpush.msra.mxu0 0.0
        %367 = vmatpush.msra.mxu0 0.0
        %368 = vmatpush.msra.mxu0 0.0
        %369 = vmatpush.msra.mxu0 0.0
        %370 = vmatpush.msra.mxu0 0.0
        %371 = vmatpush.msra.mxu0 0.0
        %372 = vmatpush.msra.mxu0 0.0
        %373 = vmatpush.msra.mxu0 %v354
        %374 = vmatmul.f32.gmra.mxu0 %v258
        %v375 = vpop.f32.mrf.mxu0
        %v376 = vadd.f32 0.0, %v375
        %377 = vmatmul.f32.gmra.mxu0 %v261
        %v378 = vpop.f32.mrf.mxu0
        %v379 = vadd.f32 0.0, %v378
        %380 = vmatmul.f32.gmra.mxu0 %v264
        %v381 = vpop.f32.mrf.mxu0
        %v382 = vadd.f32 0.0, %v381
        %383 = vmatmul.f32.gmra.mxu0 %v267
        %v384 = vpop.f32.mrf.mxu0
        %v385 = vadd.f32 0.0, %v384
        %386 = vmatmul.f32.gmra.mxu0 %v270
        %v387 = vpop.f32.mrf.mxu0
        %v388 = vadd.f32 0.0, %v387
        %389 = vmatmul.f32.gmra.mxu0 %v273
        %v390 = vpop.f32.mrf.mxu0
        %v391 = vadd.f32 0.0, %v390
        %392 = vmatmul.f32.gmra.mxu0 %v276
        %v393 = vpop.f32.mrf.mxu0
        %v394 = vadd.f32 0.0, %v393
        %395 = vmatmul.f32.gmra.mxu0 %v279
        %v396 = vpop.f32.mrf.mxu0
        %v397 = vadd.f32 0.0, %v396
        %398 = vmatmul.f32.gmra.mxu0 %v282
        %v399 = vpop.f32.mrf.mxu0
        %v400 = vadd.f32 0.0, %v399
        %401 = vmatmul.f32.gmra.mxu0 %v285
        %v402 = vpop.f32.mrf.mxu0
        %v403 = vadd.f32 0.0, %v402
        %404 = vmatmul.f32.gmra.mxu0 %v288
        %v405 = vpop.f32.mrf.mxu0
        %v406 = vadd.f32 0.0, %v405
        %407 = vmatmul.f32.gmra.mxu0 %v291
        %v408 = vpop.f32.mrf.mxu0
        %v409 = vadd.f32 0.0, %v408
        %410 = vmatmul.f32.gmra.mxu0 %v294
        %v411 = vpop.f32.mrf.mxu0
        %v412 = vadd.f32 0.0, %v411
        %413 = vmatmul.f32.gmra.mxu0 %v297
        %v414 = vpop.f32.mrf.mxu0
        %v415 = vadd.f32 0.0, %v414
        %416 = vmatmul.f32.gmra.mxu0 %v300
        %v417 = vpop.f32.mrf.mxu0
        %v418 = vadd.f32 0.0, %v417
        %419 = vmatmul.f32.gmra.mxu0 %v303
        %v420 = vpop.f32.mrf.mxu0
        %v421 = vadd.f32 0.0, %v420
        %422 = vmatmul.f32.gmra.mxu0 %v306
        %v423 = vpop.f32.mrf.mxu0
        %v424 = vadd.f32 0.0, %v423
        %425 = vmatmul.f32.gmra.mxu0 %v309
        %v426 = vpop.f32.mrf.mxu0
        %v427 = vadd.f32 0.0, %v426
        %428 = vmatmul.f32.gmra.mxu0 %v312
        %v429 = vpop.f32.mrf.mxu0
        %v430 = vadd.f32 0.0, %v429
        %431 = vmatmul.f32.gmra.mxu0 %v315
        %v432 = vpop.f32.mrf.mxu0
        %v433 = vadd.f32 0.0, %v432
        %434 = vmatmul.f32.gmra.mxu0 %v318
        %v435 = vpop.f32.mrf.mxu0
        %v436 = vadd.f32 0.0, %v435
        %437 = vmatmul.f32.gmra.mxu0 %v321
        %v438 = vpop.f32.mrf.mxu0
        %v439 = vadd.f32 0.0, %v438
        %440 = vmatmul.f32.gmra.mxu0 %v324
        %v441 = vpop.f32.mrf.mxu0
        %v442 = vadd.f32 0.0, %v441
        %443 = vmatmul.f32.gmra.mxu0 %v327
        %v444 = vpop.f32.mrf.mxu0
        %v445 = vadd.f32 0.0, %v444
        %446 = vmatmul.f32.gmra.mxu0 %v330
        %v447 = vpop.f32.mrf.mxu0
        %v448 = vadd.f32 0.0, %v447
        %449 = vmatmul.f32.gmra.mxu0 %v333
        %v450 = vpop.f32.mrf.mxu0
        %v451 = vadd.f32 0.0, %v450
        %452 = vmatmul.f32.gmra.mxu0 %v336
        %v453 = vpop.f32.mrf.mxu0
        %v454 = vadd.f32 0.0, %v453
        %455 = vmatmul.f32.gmra.mxu0 %v339
        %v456 = vpop.f32.mrf.mxu0
        %v457 = vadd.f32 0.0, %v456
        %458 = vmatmul.f32.gmra.mxu0 %v342
        %v459 = vpop.f32.mrf.mxu0
        %v460 = vadd.f32 0.0, %v459
        %461 = vmatmul.f32.gmra.mxu0 %v345
        %v462 = vpop.f32.mrf.mxu0
        %v463 = vadd.f32 0.0, %v462
        %464 = vmatmul.f32.gmra.mxu0 %v348
        %v465 = vpop.f32.mrf.mxu0
        %v466 = vadd.f32 0.0, %v465
        %467 = vmatmul.f32.gmra.mxu0 %v351
        %v468 = vpop.f32.mrf.mxu0
        %v469 = vadd.f32 0.0, %v468
        %470 = vdwg.mxu0
        %471 = vmatpush.msra.mxu0 0.0
        %472 = vmatpush.msra.mxu0 0.0
        %473 = vmatpush.msra.mxu0 0.0
        %474 = vmatpush.msra.mxu0 0.0
        %475 = vmatpush.msra.mxu0 0.0
        %476 = vmatpush.msra.mxu0 0.0
        %477 = vmatpush.msra.mxu0 0.0
        %478 = vmatpush.msra.mxu0 0.0
        %479 = vmatpush.msra.mxu0 0.0
        %480 = vmatpush.msra.mxu0 0.0
        %481 = vmatpush.msra.mxu0 0.0
        %482 = vmatpush.msra.mxu0 0.0
        %483 = vmatpush.msra.mxu0 0.0
        %484 = vmatpush.msra.mxu0 0.0
        %485 = vmatpush.msra.mxu0 0.0
        %486 = vmatpush.msra.mxu0 %v356
        %487 = vmatmul.f32.gmra.mxu0 %v258
        %v488 = vpop.f32.mrf.mxu0
        %v489 = vadd.f32 0.0, %v488
        %490 = vmatmul.f32.gmra.mxu0 %v261
        %v491 = vpop.f32.mrf.mxu0
        %v492 = vadd.f32 0.0, %v491
        %493 = vmatmul.f32.gmra.mxu0 %v264
        %v494 = vpop.f32.mrf.mxu0
        %v495 = vadd.f32 0.0, %v494
        %496 = vmatmul.f32.gmra.mxu0 %v267
        %v497 = vpop.f32.mrf.mxu0
        %v498 = vadd.f32 0.0, %v497
        %499 = vmatmul.f32.gmra.mxu0 %v270
        %v500 = vpop.f32.mrf.mxu0
        %v501 = vadd.f32 0.0, %v500
        %502 = vmatmul.f32.gmra.mxu0 %v273
        %v503 = vpop.f32.mrf.mxu0
        %v504 = vadd.f32 0.0, %v503
        %505 = vmatmul.f32.gmra.mxu0 %v276
        %v506 = vpop.f32.mrf.mxu0
        %v507 = vadd.f32 0.0, %v506
        %508 = vmatmul.f32.gmra.mxu0 %v279
        %v509 = vpop.f32.mrf.mxu0
        %v510 = vadd.f32 0.0, %v509
        %511 = vmatmul.f32.gmra.mxu0 %v282
        %v512 = vpop.f32.mrf.mxu0
        %v513 = vadd.f32 0.0, %v512
        %514 = vmatmul.f32.gmra.mxu0 %v285
        %v515 = vpop.f32.mrf.mxu0
        %v516 = vadd.f32 0.0, %v515
        %517 = vmatmul.f32.gmra.mxu0 %v288
        %v518 = vpop.f32.mrf.mxu0
        %v519 = vadd.f32 0.0, %v518
        %520 = vmatmul.f32.gmra.mxu0 %v291
        %v521 = vpop.f32.mrf.mxu0
        %v522 = vadd.f32 0.0, %v521
        %523 = vmatmul.f32.gmra.mxu0 %v294
        %v524 = vpop.f32.mrf.mxu0
        %v525 = vadd.f32 0.0, %v524
        %526 = vmatmul.f32.gmra.mxu0 %v297
        %v527 = vpop.f32.mrf.mxu0
        %v528 = vadd.f32 0.0, %v527
        %529 = vmatmul.f32.gmra.mxu0 %v300
        %v530 = vpop.f32.mrf.mxu0
        %v531 = vadd.f32 0.0, %v530
        %532 = vmatmul.f32.gmra.mxu0 %v303
        %v533 = vpop.f32.mrf.mxu0
        %v534 = vadd.f32 0.0, %v533
        %535 = vmatmul.f32.gmra.mxu0 %v306
        %v536 = vpop.f32.mrf.mxu0
        %v537 = vadd.f32 0.0, %v536
        %538 = vmatmul.f32.gmra.mxu0 %v309
        %v539 = vpop.f32.mrf.mxu0
        %v540 = vadd.f32 0.0, %v539
        %541 = vmatmul.f32.gmra.mxu0 %v312
        %v542 = vpop.f32.mrf.mxu0
        %v543 = vadd.f32 0.0, %v542
        %544 = vmatmul.f32.gmra.mxu0 %v315
        %v545 = vpop.f32.mrf.mxu0
        %v546 = vadd.f32 0.0, %v545
        %547 = vmatmul.f32.gmra.mxu0 %v318
        %v548 = vpop.f32.mrf.mxu0
        %v549 = vadd.f32 0.0, %v548
        %550 = vmatmul.f32.gmra.mxu0 %v321
        %v551 = vpop.f32.mrf.mxu0
        %v552 = vadd.f32 0.0, %v551
        %553 = vmatmul.f32.gmra.mxu0 %v324
        %v554 = vpop.f32.mrf.mxu0
        %v555 = vadd.f32 0.0, %v554
        %556 = vmatmul.f32.gmra.mxu0 %v327
        %v557 = vpop.f32.mrf.mxu0
        %v558 = vadd.f32 0.0, %v557
        %559 = vmatmul.f32.gmra.mxu0 %v330
        %v560 = vpop.f32.mrf.mxu0
        %v561 = vadd.f32 0.0, %v560
        %562 = vmatmul.f32.gmra.mxu0 %v333
        %v563 = vpop.f32.mrf.mxu0
        %v564 = vadd.f32 0.0, %v563
        %565 = vmatmul.f32.gmra.mxu0 %v336
        %v566 = vpop.f32.mrf.mxu0
        %v567 = vadd.f32 0.0, %v566
        %568 = vmatmul.f32.gmra.mxu0 %v339
        %v569 = vpop.f32.mrf.mxu0
        %v570 = vadd.f32 0.0, %v569
        %571 = vmatmul.f32.gmra.mxu0 %v342
        %v572 = vpop.f32.mrf.mxu0
        %v573 = vadd.f32 0.0, %v572
        %574 = vmatmul.f32.gmra.mxu0 %v345
        %v575 = vpop.f32.mrf.mxu0
        %v576 = vadd.f32 0.0, %v575
        %577 = vmatmul.f32.gmra.mxu0 %v348
        %v578 = vpop.f32.mrf.mxu0
        %v579 = vadd.f32 0.0, %v578
        %580 = vmatmul.f32.gmra.mxu0 %v351
        %v581 = vpop.f32.mrf.mxu0
        %v582 = vadd.f32 0.0, %v581
        %583 = vdwg.mxu0
        %584 = vst [vmem:[%s196] sm:$0xff] %v376
        %585 = vst [vmem:[%s196 + $0x8] sm:$0xff] %v489
        %586 = vst [vmem:[%s196 + $0x10] sm:$0xff] %v379
        %587 = vst [vmem:[%s196 + $0x18] sm:$0xff] %v492
        %588 = vst [vmem:[%s196 + $0x20] sm:$0xff] %v382
        %589 = vst [vmem:[%s196 + $0x28] sm:$0xff] %v495
        %590 = vst [vmem:[%s196 + $0x30] sm:$0xff] %v385
        %591 = vst [vmem:[%s196 + $0x38] sm:$0xff] %v498
        %592 = vst [vmem:[%s196 + $0x40] sm:$0xff] %v388
        %593 = vst [vmem:[%s196 + $0x48] sm:$0xff] %v501
        %594 = vst [vmem:[%s196 + $0x50] sm:$0xff] %v391
        %595 = vst [vmem:[%s196 + $0x58] sm:$0xff] %v504
        %596 = vst [vmem:[%s196 + $0x60] sm:$0xff] %v394
        %597 = vst [vmem:[%s196 + $0x68] sm:$0xff] %v507
        %598 = vst [vmem:[%s196 + $0x70] sm:$0xff] %v397
        %599 = vst [vmem:[%s196 + $0x78] sm:$0xff] %v510
        %600 = vst [vmem:[%s196 + $0x80] sm:$0xff] %v400
        %601 = vst [vmem:[%s196 + $0x88] sm:$0xff] %v513
        %602 = vst [vmem:[%s196 + $0x90] sm:$0xff] %v403
        %603 = vst [vmem:[%s196 + $0x98] sm:$0xff] %v516
        %604 = vst [vmem:[%s196 + $0xa0] sm:$0xff] %v406
        %605 = vst [vmem:[%s196 + $0xa8] sm:$0xff] %v519
        %606 = vst [vmem:[%s196 + $0xb0] sm:$0xff] %v409
        %607 = vst [vmem:[%s196 + $0xb8] sm:$0xff] %v522
        %608 = vst [vmem:[%s196 + $0xc0] sm:$0xff] %v412
        %609 = vst [vmem:[%s196 + $0xc8] sm:$0xff] %v525
        %610 = vst [vmem:[%s196 + $0xd0] sm:$0xff] %v415
        %611 = vst [vmem:[%s196 + $0xd8] sm:$0xff] %v528
        %612 = vst [vmem:[%s196 + $0xe0] sm:$0xff] %v418
        %613 = vst [vmem:[%s196 + $0xe8] sm:$0xff] %v531
        %614 = vst [vmem:[%s196 + $0xf0] sm:$0xff] %v421
        %615 = vst [vmem:[%s196 + $0xf8] sm:$0xff] %v534
        %616 = vst [vmem:[%s196 + $0x100] sm:$0xff] %v424
        %617 = vst [vmem:[%s196 + $0x108] sm:$0xff] %v537
        %618 = vst [vmem:[%s196 + $0x110] sm:$0xff] %v427
        %619 = vst [vmem:[%s196 + $0x118] sm:$0xff] %v540
        %620 = vst [vmem:[%s196 + $0x120] sm:$0xff] %v430
        %621 = vst [vmem:[%s196 + $0x128] sm:$0xff] %v543
        %622 = vst [vmem:[%s196 + $0x130] sm:$0xff] %v433
        %623 = vst [vmem:[%s196 + $0x138] sm:$0xff] %v546
        %624 = vst [vmem:[%s196 + $0x140] sm:$0xff] %v436
        %625 = vst [vmem:[%s196 + $0x148] sm:$0xff] %v549
        %626 = vst [vmem:[%s196 + $0x150] sm:$0xff] %v439
        %627 = vst [vmem:[%s196 + $0x158] sm:$0xff] %v552
        %628 = vst [vmem:[%s196 + $0x160] sm:$0xff] %v442
        %629 = vst [vmem:[%s196 + $0x168] sm:$0xff] %v555
        %630 = vst [vmem:[%s196 + $0x170] sm:$0xff] %v445
        %631 = vst [vmem:[%s196 + $0x178] sm:$0xff] %v558
        %632 = vst [vmem:[%s196 + $0x180] sm:$0xff] %v448
        %633 = vst [vmem:[%s196 + $0x188] sm:$0xff] %v561
        %634 = vst [vmem:[%s196 + $0x190] sm:$0xff] %v451
        %635 = vst [vmem:[%s196 + $0x198] sm:$0xff] %v564
        %636 = vst [vmem:[%s196 + $0x1a0] sm:$0xff] %v454
        %637 = vst [vmem:[%s196 + $0x1a8] sm:$0xff] %v567
        %638 = vst [vmem:[%s196 + $0x1b0] sm:$0xff] %v457
        %639 = vst [vmem:[%s196 + $0x1b8] sm:$0xff] %v570
        %640 = vst [vmem:[%s196 + $0x1c0] sm:$0xff] %v460
        %641 = vst [vmem:[%s196 + $0x1c8] sm:$0xff] %v573
        %642 = vst [vmem:[%s196 + $0x1d0] sm:$0xff] %v463
        %643 = vst [vmem:[%s196 + $0x1d8] sm:$0xff] %v576
        %644 = vst [vmem:[%s196 + $0x1e0] sm:$0xff] %v466
        %645 = vst [vmem:[%s196 + $0x1e8] sm:$0xff] %v579
        %646 = vst [vmem:[%s196 + $0x1f0] sm:$0xff] %v469
        %647 = vst [vmem:[%s196 + $0x1f8] sm:$0xff] %v582
        %s648 = sand.u32 %s103, 1
        %s649 = scalar_lea.sflag [#allocation3], %s648
        %s650 = sand.u32 %s103, 1
        %s651 = smul.addr %s650, 512
        %s652 = scalar_lea.vmem [#allocation2], %s651
        // Predicated region
        $region29: #{tpu_custom_call.1} parent=27 // pred_check
          %p653 = pneg %p113
        $region30: #{tpu_custom_call.1} parent=27 // pred_check_branch
          %655 = sbr.rel (%p653) target = $region32
        $region31: #{tpu_custom_call.1} parent=27 // pred_region
          %s656 = smul.u32 32, %s22
          %s657 = smul.u32 2, %s23
          %659 = vsyncadd %s649, 0
          %s660 = smul.addr %s656, 2
          %s661 = sadd.s32 %s657, %s660
          %s662 = smul.addr %s21, 64
          %s663 = sadd.s32 %s661, %s662
          %s664 = smul.addr %s663, 8
          %s665 = scalar_lea.hbm %s2, %s664
          %s666 = sshll.u32 %s652, 4
          %s667 = int_to_ptr.vmem [resolvable:$true] %s666
          %s668 = sshll.u32 %s665, 4
          %s669 = int_to_ptr.hbm [resolvable:$true] %s668
          %674 = dma.vmem_to_hbm [thread:$0]  %s667, 8192, %s669, %s649, 256, 256, 16
        $region32: #{tpu_custom_call.1} parent=27 // pred_fallthru
          _
      $region28: #{tpu_custom_call.1} parent=5 // pred_fallthru
        _
      %p675 = scmp.le.s32.totalorder 2, %s11
      // Predicated region
      $region33: #{tpu_custom_call.1} parent=5 // pred_check
        %p676 = pneg %p675
      $region34: #{tpu_custom_call.1} parent=5 // pred_check_branch
        %678 = sbr.rel (%p676) target = $region36
      $region35: #{tpu_custom_call.1} parent=5 // pred_region
        %s679 = ssub.s32 %s11, 2
        // Predicated region
        $region37: #{tpu_custom_call.1} parent=35 // pred_check
          %p680 = pneg %p119
        $region38: #{tpu_custom_call.1} parent=35 // pred_check_branch
          %682 = sbr.rel (%p680) target = $region40
        $region39: #{tpu_custom_call.1} parent=35 // pred_region
          %s683 = sand.u32 %s104, 1
          %s684 = scalar_lea.sflag [#allocation3], %s683
          %s685 = sand.u32 %s104, 1
          %s686 = smul.addr %s685, 512
          %s687 = scalar_lea.vmem [#allocation2], %s686
          %689 = dma.done %s684, 8192
        $region40: #{tpu_custom_call.1} parent=35 // pred_fallthru
          _
      $region36: #{tpu_custom_call.1} parent=5 // pred_fallthru
        _
    $region6: #{tpu_custom_call.1} parent=1 // loop_footer
      %s15 = sadd.s32 1, %s11
    $region7: #{tpu_custom_call.1} parent=1 // loop_footer_branch
      %10 = sbr.rel target = $region3
    $region8: #{tpu_custom_call.1} parent=1 // loop_exit
      _
    %690 = vsyncpa [#allocation3], 1
    %s691 = scalar_lea.sflag [#allocation3], 1
    %692 = vsyncpa %s691, 1

</llo_original>
